<compile_context>
chip_gen: v7x
topology: tpu7x:2x2x1
jax: 0.10.0
libtpu: 0.0.40
codegen_flags: <defaults>
</compile_context>

<pallas_src>
import functools

import jax
import jax.numpy as jnp
from jax.experimental import pallas as pl
from jax.experimental.pallas import tpu as pltpu


def _round_up(x, m):
    return (x + m - 1) // m * m


def _make_x_view_map(v):
    # Factory so each halo view closes over its own block offset v (no late binding).
    return lambda b, qi, oi: (b, 0, qi + v)


@functools.partial(jax.jit, static_argnames=("tile_q", "compute_dtype"))
def conv2d_pallas(X, weight, bias, *, tile_q=512, compute_dtype=jnp.bfloat16):
    """Stride-1, padding-0 cross-correlation + bias (matches the PyTorch module).

    tile_q:        lane tile of the flattened output (multiple of 128); clamped
                   to the padded output length for small images.
    compute_dtype: MXU operand dtype for x / weight (bf16 default, f32 exact);
                   accumulation is always f32.
    """
    B, I, H, W = X.shape
    O, I2, kh, kw = weight.shape
    assert I == I2 and kh <= H and kw <= W
    assert tile_q % 128 == 0

    outH, outW = H - kh + 1, W - kw + 1

    # Flattened-output ("wide") formulation: for q = oh*W + ow,
    #   Y_wide[b, o, q] = bias[o]
    #     + sum_{di,dj,c} weight[o, c, di, dj] * X_flat[b, c, q + di*W + dj]
    # Columns with ow >= outW (or q >= outH*W) are wrap-around garbage and are
    # sliced away at the end; the reshape back to (outH, W) is contiguous/free.
    Q = outH * W
    tile_q = min(tile_q, _round_up(Q, 128))

    n_q = pl.cdiv(Q, tile_q)
    Q_pad = n_q * tile_q
    max_shift = (kh - 1) * W + (kw - 1)
    n_views = 1 + pl.cdiv(max_shift, tile_q)        # halo views of X per output tile
    XQ = (n_q + n_views - 1) * tile_q               # padded flattened-X length

    # Channel padding keeps every patch-row store sublane-tile aligned
    # (16 rows for bf16, 8 for f32).
    sub = 8 if jnp.dtype(compute_dtype).itemsize == 4 else 16
    I_pad = _round_up(I, sub)
    K_tot = kh * kw * I_pad

    # O tiling keeps the result tile and the weight block bounded for large layers.
    tile_o = min(256, _round_up(O, 8))
    O_pad = _round_up(O, tile_o)
    n_o = O_pad // tile_o

    # ---- host-side prep (cheap: pads, one small transpose, dtype casts) ----
    x_flat = X.reshape(B, I, H * W)
    x_flat = jnp.pad(x_flat, ((0, 0), (0, I_pad - I), (0, XQ - H * W)))
    x_flat = x_flat.astype(compute_dtype)

    # weight[o, c, di, dj] -> w_mat[o, (di*kw + dj)*I_pad + c]   (lane-dense K axis)
    w_mat = jnp.pad(weight, ((0, O_pad - O), (0, I_pad - I), (0, 0), (0, 0)))
    w_mat = jnp.transpose(w_mat, (0, 2, 3, 1)).reshape(O_pad, K_tot).astype(compute_dtype)

    b_col = jnp.pad(bias, (0, O_pad - O)).reshape(O_pad, 1).astype(jnp.float32)

    shifts = tuple(di * W + dj for di in range(kh) for dj in range(kw))

    def kernel(*refs):
        x_refs = refs[:n_views]                 # each (I_pad, tile_q), compute_dtype
        w_ref = refs[n_views]                   # (tile_o, K_tot),     compute_dtype
        b_ref = refs[n_views + 1]               # (tile_o, 1),         f32
        o_ref = refs[n_views + 2]               # (tile_o, tile_q),    f32
        patch_ref = refs[n_views + 3]           # scratch (K_tot, tile_q), compute_dtype

        # Contiguous window [q0, q0 + n_views*tile_q) of X_flat, already in VMEM.
        if n_views > 1:
            xx = jnp.concatenate([r[...] for r in x_refs], axis=-1)
        else:
            xx = x_refs[0][...]

        # Pack the kh*kw shifted slices into one patch (rows at tile-aligned
        # offsets), then do a single deep MXU contraction (K = kh*kw*I_pad)
        # instead of kh*kw shallow K=I matmuls.
        for idx, s in enumerate(shifts):
            patch_ref[idx * I_pad:(idx + 1) * I_pad, :] = xx[:, s:s + tile_q]

        acc = jnp.dot(w_ref[...], patch_ref[...], preferred_element_type=jnp.float32)

        # Bias folded into the single lane-dense finalizing store (f32 out).
        o_ref[...] = (acc + b_ref[...]).astype(o_ref.dtype)

    in_specs = [
        pl.BlockSpec((pl.Squeezed(), I_pad, tile_q), _make_x_view_map(v))
        for v in range(n_views)
    ] + [
        # Constant blocks (index map changes only with oi): fetched once per O
        # tile.  TODO(synk): pipeline_mode=pl.Buffered(1) would single-buffer
        # them; left at the default for portability.
        pl.BlockSpec((tile_o, K_tot), lambda b, qi, oi: (oi, 0)),
        pl.BlockSpec((tile_o, 1), lambda b, qi, oi: (oi, 0)),
    ]
    out_specs = pl.BlockSpec((pl.Squeezed(), tile_o, tile_q),
                             lambda b, qi, oi: (b, oi, qi))

    y_wide = pl.pallas_call(
        kernel,
        out_shape=jax.ShapeDtypeStruct((B, O_pad, Q_pad), jnp.float32),
        grid_spec=pltpu.PrefetchScalarGridSpec(
            num_scalar_prefetch=0,
            # oi innermost so the x halo tiles stay resident across O tiles.
            grid=(B, n_q, n_o),
            in_specs=in_specs,
            out_specs=out_specs,
            scratch_shapes=[pltpu.VMEM((K_tot, tile_q), compute_dtype)],
        ),
        compiler_params=pltpu.CompilerParams(
            # All axes independent -> shard across TensorCores (v7x megacore);
            # the reduction lives inside one invocation, so no serial axis.
            dimension_semantics=("parallel", "parallel", "parallel"),
            # Tiles here are a few 100 KiB double-buffered; set vmem_limit_bytes
            # explicitly only for much larger convs (v7x has 64 MiB physical VMEM).
        ),
    )(*([x_flat] * n_views), w_mat, b_col)       # (B, O_pad, Q_pad)

    # Free contiguous reshape + cheap slices drop padding / wrap-around columns.
    Y = y_wide[:, :O, :Q].reshape(B, O, outH, W)[:, :, :, :outW]
    return Y
    # TODO(synk): replace the n_views halo views with a single manual window DMA
    # (memory_space=pl.ANY + pltpu.make_async_copy) and window along H for very
    # large images, to remove the remaining duplicated HBM reads of X.


def conv2d_reference(X, weight, bias):
    """Plain-JAX reference (lax conv) for correctness checking."""
    y = jax.lax.conv_general_dilated(
        X, weight, window_strides=(1, 1), padding="VALID",
        dimension_numbers=("NCHW", "OIHW", "NCHW"))
    return y + bias.reshape(1, -1, 1, 1)


if __name__ == "__main__":
    key = jax.random.PRNGKey(0)
    k_x, k_w, k_b = jax.random.split(key, 3)

    B, I, H, W = 2, 4, 16, 16
    O, kh, kw = 8, 3, 3

    X = jax.random.normal(k_x, (B, I, H, W), dtype=jnp.float32)
    weight = jax.random.normal(k_w, (O, I, kh, kw), dtype=jnp.float32)
    bias = jax.random.normal(k_b, (O,), dtype=jnp.float32)

    Y_ref = conv2d_reference(X, weight, bias)

    # Exact path (f32 MXU operands): tight check against the f32 reference.
    Y32 = jax.block_until_ready(conv2d_pallas(X, weight, bias, compute_dtype=jnp.float32))
    assert Y32.shape == (B, O, H - kh + 1, W - kw + 1)
    assert jnp.allclose(Y32, Y_ref, atol=1e-4, rtol=1e-4), float(jnp.max(jnp.abs(Y32 - Y_ref)))

    # Default fast path (bf16 MXU operands, f32 accumulation): looser tolerance
    # only because the operands are rounded to bf16.
    Y = jax.block_until_ready(conv2d_pallas(X, weight, bias))
    assert Y.shape == (B, O, H - kh + 1, W - kw + 1)
    assert jnp.allclose(Y, Y_ref, atol=1e-1, rtol=1e-2), float(jnp.max(jnp.abs(Y - Y_ref)))

    print("KERNEL_OK")
</pallas_src>

<mosaic_0001>
module attributes {stable_mosaic.version = 11 : i64} {
  func.func @kernel(%arg0: i32, %arg1: i32, %arg2: i32, %arg3: memref<1x8x256xf32, #tpu.memory_space<vmem>>, %arg4: memref<1x8x256xf32, #tpu.memory_space<vmem>>, %arg5: memref<8x72xf32, #tpu.memory_space<vmem>>, %arg6: memref<8x1xf32, #tpu.memory_space<vmem>>, %arg7: memref<1x8x256xf32, #tpu.memory_space<vmem>>, %arg8: memref<72x256xf32, #tpu.memory_space<vmem>>) attributes {dimension_semantics = [#tpu.dimension_semantics<parallel>, #tpu.dimension_semantics<parallel>, #tpu.dimension_semantics<parallel>], iteration_bounds = array<i64: 2, 1, 1>, scalar_prefetch = 0 : i64, scratch_operands = 1 : i64, tpu.core_type = #tpu.core_type<tc>, window_params = [{transform_indices = @transform_0, window_bounds = array<i64: 1, 8, 256>}, {transform_indices = @transform_1, window_bounds = array<i64: 1, 8, 256>}, {transform_indices = @transform_2, window_bounds = array<i64: 8, 72>}, {transform_indices = @transform_3, window_bounds = array<i64: 8, 1>}, {transform_indices = @transform_4, window_bounds = array<i64: 1, 8, 256>}]} {
    %c0 = arith.constant 0 : index
    %c0_0 = arith.constant 0 : index
    %c0_1 = arith.constant 0 : index
    %0 = vector.load %arg3[%c0, %c0_0, %c0_1] : memref<1x8x256xf32, #tpu.memory_space<vmem>>, vector<1x8x256xf32>
    %1 = vector.shape_cast %0 : vector<1x8x256xf32> to vector<8x256xf32>
    %c0_2 = arith.constant 0 : index
    %c0_3 = arith.constant 0 : index
    %c0_4 = arith.constant 0 : index
    %2 = vector.load %arg4[%c0_2, %c0_3, %c0_4] : memref<1x8x256xf32, #tpu.memory_space<vmem>>, vector<1x8x256xf32>
    %3 = vector.shape_cast %2 : vector<1x8x256xf32> to vector<8x256xf32>
    %4 = tpu.concatenate %1, %3 in 1 : vector<8x256xf32>, vector<8x256xf32> -> vector<8x512xf32>
    %5 = vector.extract_strided_slice %4 {offsets = [0, 0], sizes = [8, 256], strides = [1, 1]} : vector<8x512xf32> to vector<8x256xf32>
    %c0_5 = arith.constant 0 : index
    %c0_6 = arith.constant 0 : index
    %6 = vector.load %arg8[%c0_5, %c0_6] : memref<72x256xf32, #tpu.memory_space<vmem>>, vector<8x256xf32>
    tpu.vector_store %arg8[%c0_5, %c0_6], %5 {strides = array<i32>} : memref<72x256xf32, #tpu.memory_space<vmem>>, vector<8x256xf32>,
    %7 = vector.extract_strided_slice %4 {offsets = [0, 1], sizes = [8, 256], strides = [1, 1]} : vector<8x512xf32> to vector<8x256xf32>
    %c8 = arith.constant 8 : index
    %c0_7 = arith.constant 0 : index
    %8 = vector.load %arg8[%c8, %c0_7] : memref<72x256xf32, #tpu.memory_space<vmem>>, vector<8x256xf32>
    tpu.vector_store %arg8[%c8, %c0_7], %7 {strides = array<i32>} : memref<72x256xf32, #tpu.memory_space<vmem>>, vector<8x256xf32>,
    %9 = vector.extract_strided_slice %4 {offsets = [0, 2], sizes = [8, 256], strides = [1, 1]} : vector<8x512xf32> to vector<8x256xf32>
    %c16 = arith.constant 16 : index
    %c0_8 = arith.constant 0 : index
    %10 = vector.load %arg8[%c16, %c0_8] : memref<72x256xf32, #tpu.memory_space<vmem>>, vector<8x256xf32>
    tpu.vector_store %arg8[%c16, %c0_8], %9 {strides = array<i32>} : memref<72x256xf32, #tpu.memory_space<vmem>>, vector<8x256xf32>,
    %11 = vector.extract_strided_slice %4 {offsets = [0, 16], sizes = [8, 256], strides = [1, 1]} : vector<8x512xf32> to vector<8x256xf32>
    %c24 = arith.constant 24 : index
    %c0_9 = arith.constant 0 : index
    %12 = vector.load %arg8[%c24, %c0_9] : memref<72x256xf32, #tpu.memory_space<vmem>>, vector<8x256xf32>
    tpu.vector_store %arg8[%c24, %c0_9], %11 {strides = array<i32>} : memref<72x256xf32, #tpu.memory_space<vmem>>, vector<8x256xf32>,
    %13 = vector.extract_strided_slice %4 {offsets = [0, 17], sizes = [8, 256], strides = [1, 1]} : vector<8x512xf32> to vector<8x256xf32>
    %c32 = arith.constant 32 : index
    %c0_10 = arith.constant 0 : index
    %14 = vector.load %arg8[%c32, %c0_10] : memref<72x256xf32, #tpu.memory_space<vmem>>, vector<8x256xf32>
    tpu.vector_store %arg8[%c32, %c0_10], %13 {strides = array<i32>} : memref<72x256xf32, #tpu.memory_space<vmem>>, vector<8x256xf32>,
    %15 = vector.extract_strided_slice %4 {offsets = [0, 18], sizes = [8, 256], strides = [1, 1]} : vector<8x512xf32> to vector<8x256xf32>
    %c40 = arith.constant 40 : index
    %c0_11 = arith.constant 0 : index
    %16 = vector.load %arg8[%c40, %c0_11] : memref<72x256xf32, #tpu.memory_space<vmem>>, vector<8x256xf32>
    tpu.vector_store %arg8[%c40, %c0_11], %15 {strides = array<i32>} : memref<72x256xf32, #tpu.memory_space<vmem>>, vector<8x256xf32>,
    %17 = vector.extract_strided_slice %4 {offsets = [0, 32], sizes = [8, 256], strides = [1, 1]} : vector<8x512xf32> to vector<8x256xf32>
    %c48 = arith.constant 48 : index
    %c0_12 = arith.constant 0 : index
    %18 = vector.load %arg8[%c48, %c0_12] : memref<72x256xf32, #tpu.memory_space<vmem>>, vector<8x256xf32>
    tpu.vector_store %arg8[%c48, %c0_12], %17 {strides = array<i32>} : memref<72x256xf32, #tpu.memory_space<vmem>>, vector<8x256xf32>,
    %19 = vector.extract_strided_slice %4 {offsets = [0, 33], sizes = [8, 256], strides = [1, 1]} : vector<8x512xf32> to vector<8x256xf32>
    %c56 = arith.constant 56 : index
    %c0_13 = arith.constant 0 : index
    %20 = vector.load %arg8[%c56, %c0_13] : memref<72x256xf32, #tpu.memory_space<vmem>>, vector<8x256xf32>
    tpu.vector_store %arg8[%c56, %c0_13], %19 {strides = array<i32>} : memref<72x256xf32, #tpu.memory_space<vmem>>, vector<8x256xf32>,
    %21 = vector.extract_strided_slice %4 {offsets = [0, 34], sizes = [8, 256], strides = [1, 1]} : vector<8x512xf32> to vector<8x256xf32>
    %c64 = arith.constant 64 : index
    %c0_14 = arith.constant 0 : index
    %22 = vector.load %arg8[%c64, %c0_14] : memref<72x256xf32, #tpu.memory_space<vmem>>, vector<8x256xf32>
    tpu.vector_store %arg8[%c64, %c0_14], %21 {strides = array<i32>} : memref<72x256xf32, #tpu.memory_space<vmem>>, vector<8x256xf32>,
    %c0_15 = arith.constant 0 : index
    %c0_16 = arith.constant 0 : index
    %23 = vector.load %arg5[%c0_15, %c0_16] : memref<8x72xf32, #tpu.memory_space<vmem>>, vector<8x72xf32>
    %c0_17 = arith.constant 0 : index
    %c0_18 = arith.constant 0 : index
    %24 = vector.load %arg8[%c0_17, %c0_18] : memref<72x256xf32, #tpu.memory_space<vmem>>, vector<72x256xf32>
    %cst = arith.constant dense<0.000000e+00> : vector<8x256xf32>
    %25 = tpu.matmul %23, %24, %cst {dimension_numbers = #tpu.dot_dimension_numbers<[1], [0], [0], [1], [0, 0, 1, 1], [], []>} : vector<8x72xf32>, vector<72x256xf32>, vector<8x256xf32> -> vector<8x256xf32>
    %c0_19 = arith.constant 0 : index
    %c0_20 = arith.constant 0 : index
    %26 = vector.load %arg6[%c0_19, %c0_20] : memref<8x1xf32, #tpu.memory_space<vmem>>, vector<8x1xf32>
    %27 = vector.broadcast %26 : vector<8x1xf32> to vector<8x256xf32>
    %28 = arith.addf %25, %27 : vector<8x256xf32>
    %c0_21 = arith.constant 0 : index
    %c0_22 = arith.constant 0 : index
    %c0_23 = arith.constant 0 : index
    %29 = vector.load %arg7[%c0_21, %c0_22, %c0_23] : memref<1x8x256xf32, #tpu.memory_space<vmem>>, vector<1x8x256xf32>
    %30 = vector.shape_cast %29 : vector<1x8x256xf32> to vector<8x256xf32>
    %31 = vector.shape_cast %28 : vector<8x256xf32> to vector<1x8x256xf32>
    tpu.vector_store %arg7[%c0_21, %c0_22, %c0_23], %31 {strides = array<i32>} : memref<1x8x256xf32, #tpu.memory_space<vmem>>, vector<1x8x256xf32>,
    return
  }
  func.func @transform_0(%arg0: i32, %arg1: i32, %arg2: i32) -> (i32, i32, i32) {
    %c0_i32 = arith.constant 0 : i32
    %0 = arith.addi %arg1, %c0_i32 : i32
    %c0_i32_0 = arith.constant 0 : i32
    %c0_i32_1 = arith.constant 0 : i32
    return %arg0, %c0_i32_0, %0 : i32, i32, i32
  }
  func.func @transform_1(%arg0: i32, %arg1: i32, %arg2: i32) -> (i32, i32, i32) {
    %c1_i32 = arith.constant 1 : i32
    %0 = arith.addi %arg1, %c1_i32 : i32
    %c0_i32 = arith.constant 0 : i32
    %c0_i32_0 = arith.constant 0 : i32
    return %arg0, %c0_i32, %0 : i32, i32, i32
  }
  func.func @transform_2(%arg0: i32, %arg1: i32, %arg2: i32) -> (i32, i32) {
    %c0_i32 = arith.constant 0 : i32
    %c0_i32_0 = arith.constant 0 : i32
    return %arg2, %c0_i32 : i32, i32
  }
  func.func @transform_3(%arg0: i32, %arg1: i32, %arg2: i32) -> (i32, i32) {
    %c0_i32 = arith.constant 0 : i32
    %c0_i32_0 = arith.constant 0 : i32
    return %arg2, %c0_i32 : i32, i32
  }
  func.func @transform_4(%arg0: i32, %arg1: i32, %arg2: i32) -> (i32, i32, i32) {
    %c0_i32 = arith.constant 0 : i32
    return %arg0, %arg2, %arg1 : i32, i32, i32
  }
}

</mosaic_0001>

<llo_original>
// kernel: conv2d_pallas.1
$region0: #{conv2d_pallas.1}
  #allocation0 [shape = 'u32[]', space=smem, size = 0x4, offset = 0x4, fixed_abs, tag = 'smem constant byte address 0x4 - core index']
  #allocation1 [shape = 'u32[144,128]{1,0:T(1,128)}', space=vmem, size = 0x12000, scoped, tag = 'internal scratch']
  #allocation2 [shape = 'f32[72,256]{1,0:T(8,128)}', space=vmem, size = 0x12000, scoped, tag = 'scratch operand']
  %s0 = inlined_call_operand.vmem [shape: f32[2,8,512], index: 0, kind: input, shape index: {}, may-alias: {0,1}]
  %s1 = inlined_call_operand.vmem [shape: f32[2,8,512], index: 1, kind: input, shape index: {}, may-alias: {0,1}]
  %s2 = inlined_call_operand.vmem [shape: f32[8,72], index: 2, kind: input, shape index: {}]
  %s3 = inlined_call_operand.vmem [shape: f32[8,1], index: 3, kind: input, shape index: {}]
  %s4 = inlined_call_operand.vmem [shape: f32[2,8,256], index: 4, kind: output, shape index: {}]
  %s5 = sld [smem:[#allocation0]]
  $region49: #{conv2d_pallas.1} parent=0
    _
  %s7 = ssub.s32 1, %s5
  %s8 = scalar_select 0, %s7, %s5
  loop: start=0, step=1, limit=4
  $region2: #{conv2d_pallas.1} parent=0 // loop_pre_header
    _
  $region3: #{conv2d_pallas.1} parent=0 // loop_header
    %s10 = sphi 0, %s14
    %p11 = scmp.ge.s32.totalorder %s10, 4
    %s17 = sphi 0, %s36
    %s18 = sphi 0, %s32
    %s19 = sphi 0, %s28
    %s20 = sphi 0, %s17
    %s21 = sphi 0, %s18
    %s22 = sphi 0, %s19
    %s23 = sphi 0, %s20
    %s24 = sphi 0, %s21
    %s25 = sphi 0, %s22
    %s41 = sphi 0, %s43
    %s44 = sphi 0, %s41
    %s45 = sphi 0, %s44
    %s61 = sphi 0, %s45
    %s71 = sphi 0, %s73
    %s74 = sphi 0, %s71
    %s75 = sphi 0, %s74
    %s91 = sphi 0, %s75
    %s97 = sphi 0, %s99
    %s100 = sphi 0, %s97
    %s101 = sphi 0, %s100
    %s117 = sphi 0, %s101
    %s123 = sphi 0, %s125
    %s126 = sphi 0, %s123
    %s127 = sphi 0, %s126
    %s143 = sphi 0, %s127
    %s153 = sphi 0, %s155
    %s156 = sphi 0, %s153
    %s157 = sphi 0, %s156
    %s173 = sphi 0, %s157
  $region4: #{conv2d_pallas.1} parent=0 // loop_header_branch
    %13 = sbr.rel (%p11) target = $region8
  $region5: #{conv2d_pallas.1} parent=0 // loop_body
    %s15 = ssub.s32 %s10, 1
    %s16 = ssub.s32 %s10, 2
    %s26 = sadd.s32 1, %s19
    %p27 = scmp.ge.s32.totalorder %s26, 1
    %s28 = scalar_select %p27, 0, %s26
    %s29 = sadd.s32 1, %s18
    %s30 = scalar_select %p27, %s29, %s18
    %p31 = scmp.ge.s32.totalorder %s30, 1
    %s32 = scalar_select %p31, 0, %s30
    %s33 = sadd.s32 1, %s17
    %s34 = scalar_select %p31, %s33, %s17
    %p35 = scmp.ge.s32.totalorder %s34, 2
    %s36 = scalar_select %p35, 0, %s34
    %s37 = ssub.s32 %s17, %s36
    %s38 = ssub.s32 %s18, %s32
    %s39 = sor.u32 %s37, %s38
    %p40 = scmp.eq.s32.totalorder %s39, 0
    %s42 = sadd.s32 %s41, 1
    %s43 = scalar_select %p40, %s41, %s42
    %p46 = pneg %p40
    %p47 = scmp.eq.s32.totalorder %s10, 1
    %p48 = por %p46, %p47
    %p49 = scmp.ne.s32.totalorder %s41, %s44
    %p50 = scmp.eq.s32.totalorder %s10, 0
    %p51 = por %p49, %p50
    %p52 = scmp.ne.s32.totalorder %s41, %s44
    %p53 = scmp.eq.s32.totalorder %s15, 1
    %p54 = por %p52, %p53
    %p55 = scmp.ne.s32.totalorder %s44, %s45
    %p56 = scmp.eq.s32.totalorder %s15, 0
    %p57 = por %p55, %p56
    %p58 = scmp.ne.s32.totalorder %s44, %s45
    %p59 = scmp.eq.s32.totalorder %s16, 1
    %p60 = por %p58, %p59
    %p62 = scmp.ne.s32.totalorder %s45, %s61
    %p63 = scmp.eq.s32.totalorder %s16, 0
    %p64 = por %p62, %p63
    %s65 = sadd.s32 %s18, 1
    %s66 = sadd.s32 %s32, 1
    %s67 = ssub.s32 %s17, %s36
    %s68 = ssub.s32 %s65, %s66
    %s69 = sor.u32 %s67, %s68
    %p70 = scmp.eq.s32.totalorder %s69, 0
    %s72 = sadd.s32 %s71, 1
    %s73 = scalar_select %p70, %s71, %s72
    %p76 = pneg %p70
    %p77 = scmp.eq.s32.totalorder %s10, 1
    %p78 = por %p76, %p77
    %p79 = scmp.ne.s32.totalorder %s71, %s74
    %p80 = scmp.eq.s32.totalorder %s10, 0
    %p81 = por %p79, %p80
    %p82 = scmp.ne.s32.totalorder %s71, %s74
    %p83 = scmp.eq.s32.totalorder %s15, 1
    %p84 = por %p82, %p83
    %p85 = scmp.ne.s32.totalorder %s74, %s75
    %p86 = scmp.eq.s32.totalorder %s15, 0
    %p87 = por %p85, %p86
    %p88 = scmp.ne.s32.totalorder %s74, %s75
    %p89 = scmp.eq.s32.totalorder %s16, 1
    %p90 = por %p88, %p89
    %p92 = scmp.ne.s32.totalorder %s75, %s91
    %p93 = scmp.eq.s32.totalorder %s16, 0
    %p94 = por %p92, %p93
    %s95 = ssub.s32 %s19, %s28
    %p96 = scmp.eq.s32.totalorder %s95, 0
    %s98 = sadd.s32 %s97, 1
    %s99 = scalar_select %p96, %s97, %s98
    %p102 = pneg %p96
    %p103 = scmp.eq.s32.totalorder %s10, 1
    %p104 = por %p102, %p103
    %p105 = scmp.ne.s32.totalorder %s97, %s100
    %p106 = scmp.eq.s32.totalorder %s10, 0
    %p107 = por %p105, %p106
    %p108 = scmp.ne.s32.totalorder %s97, %s100
    %p109 = scmp.eq.s32.totalorder %s15, 1
    %p110 = por %p108, %p109
    %p111 = scmp.ne.s32.totalorder %s100, %s101
    %p112 = scmp.eq.s32.totalorder %s15, 0
    %p113 = por %p111, %p112
    %p114 = scmp.ne.s32.totalorder %s100, %s101
    %p115 = scmp.eq.s32.totalorder %s16, 1
    %p116 = por %p114, %p115
    %p118 = scmp.ne.s32.totalorder %s101, %s117
    %p119 = scmp.eq.s32.totalorder %s16, 0
    %p120 = por %p118, %p119
    %s121 = ssub.s32 %s19, %s28
    %p122 = scmp.eq.s32.totalorder %s121, 0
    %s124 = sadd.s32 %s123, 1
    %s125 = scalar_select %p122, %s123, %s124
    %p128 = pneg %p122
    %p129 = scmp.eq.s32.totalorder %s10, 1
    %p130 = por %p128, %p129
    %p131 = scmp.ne.s32.totalorder %s123, %s126
    %p132 = scmp.eq.s32.totalorder %s10, 0
    %p133 = por %p131, %p132
    %p134 = scmp.ne.s32.totalorder %s123, %s126
    %p135 = scmp.eq.s32.totalorder %s15, 1
    %p136 = por %p134, %p135
    %p137 = scmp.ne.s32.totalorder %s126, %s127
    %p138 = scmp.eq.s32.totalorder %s15, 0
    %p139 = por %p137, %p138
    %p140 = scmp.ne.s32.totalorder %s126, %s127
    %p141 = scmp.eq.s32.totalorder %s16, 1
    %p142 = por %p140, %p141
    %p144 = scmp.ne.s32.totalorder %s127, %s143
    %p145 = scmp.eq.s32.totalorder %s16, 0
    %p146 = por %p144, %p145
    %s147 = ssub.s32 %s17, %s36
    %s148 = ssub.s32 %s19, %s28
    %s149 = sor.u32 %s147, %s148
    %s150 = ssub.s32 %s18, %s32
    %s151 = sor.u32 %s149, %s150
    %p152 = scmp.eq.s32.totalorder %s151, 0
    %s154 = sadd.s32 %s153, 1
    %s155 = scalar_select %p152, %s153, %s154
    %p158 = pneg %p152
    %p159 = scmp.eq.s32.totalorder %s10, 1
    %p160 = por %p158, %p159
    %p161 = scmp.ne.s32.totalorder %s153, %s156
    %p162 = scmp.eq.s32.totalorder %s10, 0
    %p163 = por %p161, %p162
    %p164 = scmp.ne.s32.totalorder %s153, %s156
    %p165 = scmp.eq.s32.totalorder %s15, 1
    %p166 = por %p164, %p165
    %p167 = scmp.ne.s32.totalorder %s156, %s157
    %p168 = scmp.eq.s32.totalorder %s15, 0
    %p169 = por %p167, %p168
    %p170 = scmp.ne.s32.totalorder %s156, %s157
    %p171 = scmp.eq.s32.totalorder %s16, 1
    %p172 = por %p170, %p171
    %p174 = scmp.ne.s32.totalorder %s157, %s173
    %p175 = scmp.eq.s32.totalorder %s16, 0
    %p176 = por %p174, %p175
    %p177 = scmp.le.s32.totalorder 1, %s10
    %p178 = scmp.lt.s32.totalorder %s10, 3
    %p179 = pnand %p177, %p178
    %p180 = pneg %p179
    // Predicated region
    $region9: #{conv2d_pallas.1} parent=5 // pred_check
      _
    $region10: #{conv2d_pallas.1} parent=5 // pred_check_branch
      %182 = sbr.rel (%p179) target = $region12
    $region11: #{conv2d_pallas.1} parent=5 // pred_region
      %s183 = ssub.s32 %s10, 1
      // Predicated region
      $region13: #{conv2d_pallas.1} parent=11 // pred_check
        %p184 = pneg %p113
      $region14: #{conv2d_pallas.1} parent=11 // pred_check_branch
        %186 = sbr.rel (%p184) target = $region16
      $region15: #{conv2d_pallas.1} parent=11 // pred_region
        %p187 = scmp.lt.s32.totalorder %s22, 0
        %s188 = scalar_select %p187, %s22, 0
        %s189 = smul.addr %s188, 8
        %s190 = scalar_lea.vmem %s2, %s189
      $region16: #{conv2d_pallas.1} parent=11 // pred_fallthru
        _
      // Predicated region
      $region17: #{conv2d_pallas.1} parent=11 // pred_check
        %p191 = pneg %p139
      $region18: #{conv2d_pallas.1} parent=11 // pred_check_branch
        %193 = sbr.rel (%p191) target = $region20
      $region19: #{conv2d_pallas.1} parent=11 // pred_region
        %p194 = scmp.lt.s32.totalorder %s22, 0
        %s195 = scalar_select %p194, %s22, 0
        %s196 = smul.addr %s195, 8
        %s197 = scalar_lea.vmem %s3, %s196
      $region20: #{conv2d_pallas.1} parent=11 // pred_fallthru
        _
    $region12: #{conv2d_pallas.1} parent=5 // pred_fallthru
      _
    %p198 = scmp.lt.s32.totalorder %s10, 2
    // Predicated region
    $region21: #{conv2d_pallas.1} parent=5 // pred_check
      %p199 = pneg %p198
    $region22: #{conv2d_pallas.1} parent=5 // pred_check_branch
      %201 = sbr.rel (%p199) target = $region24
    $region23: #{conv2d_pallas.1} parent=5 // pred_region
      // Predicated region
      $region25: #{conv2d_pallas.1} parent=23 // pred_check
        %p202 = pneg %p51
      $region26: #{conv2d_pallas.1} parent=23 // pred_check_branch
        %204 = sbr.rel (%p202) target = $region28
      $region27: #{conv2d_pallas.1} parent=23 // pred_region
        %s205 = smul.u32 2, %s18
        %p206 = scmp.lt.s32.totalorder %s17, 1
        %s207 = scalar_select %p206, %s17, 1
        %p208 = scmp.lt.s32.totalorder %s205, 3
        %s209 = scalar_select %p208, %s205, 3
        %s210 = smul.addr %s207, 4
        %s211 = sadd.s32 %s209, %s210
        %s212 = smul.addr %s211, 8
        %s213 = scalar_lea.vmem %s0, %s212
        %s214 = smul.u32 2, %s18
      $region28: #{conv2d_pallas.1} parent=23 // pred_fallthru
        _
      // Predicated region
      $region29: #{conv2d_pallas.1} parent=23 // pred_check
        %p215 = pneg %p81
      $region30: #{conv2d_pallas.1} parent=23 // pred_check_branch
        %217 = sbr.rel (%p215) target = $region32
      $region31: #{conv2d_pallas.1} parent=23 // pred_region
        %s218 = sadd.s32 %s18, 1
        %s219 = smul.u32 2, %s218
        %p220 = scmp.lt.s32.totalorder %s17, 1
        %s221 = scalar_select %p220, %s17, 1
        %p222 = scmp.lt.s32.totalorder %s219, 3
        %s223 = scalar_select %p222, %s219, 3
        %s224 = smul.addr %s221, 4
        %s225 = sadd.s32 %s223, %s224
        %s226 = smul.addr %s225, 8
        %s227 = scalar_lea.vmem %s1, %s226
        %s228 = sadd.s32 %s18, 1
        %s229 = smul.u32 2, %s228
      $region32: #{conv2d_pallas.1} parent=23 // pred_fallthru
        _
    $region24: #{conv2d_pallas.1} parent=5 // pred_fallthru
      _
    %p230 = scmp.le.s32.totalorder 1, %s10
    %p231 = scmp.lt.s32.totalorder %s10, 3
    %p232 = pnand %p230, %p231
    %p233 = pneg %p232
    // Predicated region
    $region33: #{conv2d_pallas.1} parent=5 // pred_check
      _
    $region34: #{conv2d_pallas.1} parent=5 // pred_check_branch
      %235 = sbr.rel (%p232) target = $region36
    $region35: #{conv2d_pallas.1} parent=5 // pred_region
      %s236 = ssub.s32 %s10, 1
      %s237 = smul.u32 2, %s21
      %p238 = scmp.lt.s32.totalorder %s20, 1
      %s239 = scalar_select %p238, %s20, 1
      %p240 = scmp.lt.s32.totalorder %s237, 3
      %s241 = scalar_select %p240, %s237, 3
      %s242 = smul.addr %s239, 4
      %s243 = sadd.s32 %s241, %s242
      %s244 = smul.addr %s243, 8
      %s245 = scalar_lea.vmem %s0, %s244
      %p246 = pneg %p57
      %p247 = pneg %p54
      %s248 = sadd.s32 %s21, 1
      %s249 = smul.u32 2, %s248
      %p250 = scmp.lt.s32.totalorder %s20, 1
      %s251 = scalar_select %p250, %s20, 1
      %p252 = scmp.lt.s32.totalorder %s249, 3
      %s253 = scalar_select %p252, %s249, 3
      %s254 = smul.addr %s251, 4
      %s255 = sadd.s32 %s253, %s254
      %s256 = smul.addr %s255, 8
      %s257 = scalar_lea.vmem %s1, %s256
      %p258 = pneg %p87
      %p259 = pneg %p84
      %p260 = scmp.lt.s32.totalorder %s22, 0
      %s261 = scalar_select %p260, %s22, 0
      %s262 = smul.addr %s261, 8
      %s263 = scalar_lea.vmem %s2, %s262
      %p264 = pneg %p113
      %p265 = pneg %p110
      %p266 = scmp.lt.s32.totalorder %s22, 0
      %s267 = scalar_select %p266, %s22, 0
      %s268 = smul.addr %s267, 8
      %s269 = scalar_lea.vmem %s3, %s268
      %p270 = pneg %p139
      %p271 = pneg %p136
      %p272 = pneg %p169
      %p273 = pneg %p166
      %s274 = smul.u32 2, %s21
      %p275 = scmp.lt.s32.totalorder %s20, 1
      %s276 = scalar_select %p275, %s20, 1
      %p277 = scmp.lt.s32.totalorder %s22, 0
      %s278 = scalar_select %p277, %s22, 0
      %p279 = scmp.lt.s32.totalorder %s274, 1
      %s280 = scalar_select %p279, %s274, 1
      %s281 = smul.addr %s278, 2
      %s282 = sadd.s32 %s280, %s281
      %s283 = smul.addr %s276, 2
      %s284 = sadd.s32 %s282, %s283
      %s285 = smul.addr %s284, 8
      %s286 = scalar_lea.vmem %s4, %s285
      %s287 = smul.u32 2, %s21
      %p288 = scmp.lt.s32.totalorder %s20, 1
      %s289 = scalar_select %p288, %s20, 1
      %p290 = scmp.lt.s32.totalorder %s287, 3
      %s291 = scalar_select %p290, %s287, 3
      %s292 = smul.addr %s289, 4
      %s293 = sadd.s32 %s291, %s292
      %s294 = smul.addr %s293, 8
      %s295 = scalar_lea.vmem %s0, %s294
      %s296 = smul.u32 2, %s21
      %s297 = sadd.s32 %s21, 1
      %s298 = smul.u32 2, %s297
      %p299 = scmp.lt.s32.totalorder %s20, 1
      %s300 = scalar_select %p299, %s20, 1
      %p301 = scmp.lt.s32.totalorder %s298, 3
      %s302 = scalar_select %p301, %s298, 3
      %s303 = smul.addr %s300, 4
      %s304 = sadd.s32 %s302, %s303
      %s305 = smul.addr %s304, 8
      %s306 = scalar_lea.vmem %s1, %s305
      %s307 = sadd.s32 %s21, 1
      %s308 = smul.u32 2, %s307
      %p309 = scmp.lt.s32.totalorder %s22, 0
      %s310 = scalar_select %p309, %s22, 0
      %s311 = smul.addr %s310, 8
      %s312 = scalar_lea.vmem %s2, %s311
      %p313 = scmp.lt.s32.totalorder %s22, 0
      %s314 = scalar_select %p313, %s22, 0
      %s315 = smul.addr %s314, 8
      %s316 = scalar_lea.vmem %s3, %s315
      %s317 = smul.u32 2, %s21
      %p318 = scmp.lt.s32.totalorder %s20, 1
      %s319 = scalar_select %p318, %s20, 1
      %p320 = scmp.lt.s32.totalorder %s22, 0
      %s321 = scalar_select %p320, %s22, 0
      %p322 = scmp.lt.s32.totalorder %s317, 1
      %s323 = scalar_select %p322, %s317, 1
      %s324 = smul.addr %s321, 2
      %s325 = sadd.s32 %s323, %s324
      %s326 = smul.addr %s319, 2
      %s327 = sadd.s32 %s325, %s326
      %s328 = smul.addr %s327, 8
      %s329 = scalar_lea.vmem %s4, %s328
      %s330 = smul.u32 2, %s21
      %v331 = vld [vmem:[%s295] sm:$0xff]
      %v332 = vld [vmem:[%s295 + $0x8] sm:$0xff]
      %v333 = vld [vmem:[%s306] sm:$0xff]
      %334 = vst [vmem:[#allocation2] sm:$0xff] %v331
      %335 = vst [vmem:[#allocation2 + $0x8] sm:$0xff] %v332
      %339 = vrot.lane.b32.xlu0 %v331, 127
      %v340 = vpop.permute.xlu0 %339
      %341 = vrot.lane.b32.xlu0 %v332, 127
      %v342 = vpop.permute.xlu0 %341
      %343 = vrot.lane.b32.xlu0 %v333, 127
      %v344 = vpop.permute.xlu0 %343
      %vm345 = vcmask 1039360
      %v346 = vsel %vm345, %v340, %v342
      %v347 = vsel %vm345, %v342, %v344
      %350 = vst [vmem:[#allocation2 + $0x10] sm:$0xff] %v346
      %351 = vst [vmem:[#allocation2 + $0x18] sm:$0xff] %v347
      %352 = vrot.lane.b32.xlu0 %v331, 126
      %v353 = vpop.permute.xlu0 %352
      %354 = vrot.lane.b32.xlu0 %v332, 126
      %v355 = vpop.permute.xlu0 %354
      %356 = vrot.lane.b32.xlu0 %v333, 126
      %v357 = vpop.permute.xlu0 %356
      %vm358 = vcmask 1031168
      %v359 = vsel %vm358, %v353, %v355
      %v360 = vsel %vm358, %v355, %v357
      %363 = vst [vmem:[#allocation2 + $0x20] sm:$0xff] %v359
      %364 = vst [vmem:[#allocation2 + $0x28] sm:$0xff] %v360
      %365 = vrot.lane.b32.xlu0 %v331, 112
      %v366 = vpop.permute.xlu0 %365
      %367 = vrot.lane.b32.xlu0 %v332, 112
      %v368 = vpop.permute.xlu0 %367
      %369 = vrot.lane.b32.xlu0 %v333, 112
      %v370 = vpop.permute.xlu0 %369
      %vm371 = vcmask 916480
      %v372 = vsel %vm371, %v366, %v368
      %v373 = vsel %vm371, %v368, %v370
      %376 = vst [vmem:[#allocation2 + $0x30] sm:$0xff] %v372
      %377 = vst [vmem:[#allocation2 + $0x38] sm:$0xff] %v373
      %378 = vrot.lane.b32.xlu0 %v331, 111
      %v379 = vpop.permute.xlu0 %378
      %380 = vrot.lane.b32.xlu0 %v332, 111
      %v381 = vpop.permute.xlu0 %380
      %382 = vrot.lane.b32.xlu0 %v333, 111
      %v383 = vpop.permute.xlu0 %382
      %vm384 = vcmask 908288
      %v385 = vsel %vm384, %v379, %v381
      %v386 = vsel %vm384, %v381, %v383
      %389 = vst [vmem:[#allocation2 + $0x40] sm:$0xff] %v385
      %390 = vst [vmem:[#allocation2 + $0x48] sm:$0xff] %v386
      %391 = vrot.lane.b32.xlu0 %v331, 110
      %v392 = vpop.permute.xlu0 %391
      %393 = vrot.lane.b32.xlu0 %v332, 110
      %v394 = vpop.permute.xlu0 %393
      %395 = vrot.lane.b32.xlu0 %v333, 110
      %v396 = vpop.permute.xlu0 %395
      %vm397 = vcmask 900096
      %v398 = vsel %vm397, %v392, %v394
      %v399 = vsel %vm397, %v394, %v396
      %402 = vst [vmem:[#allocation2 + $0x50] sm:$0xff] %v398
      %403 = vst [vmem:[#allocation2 + $0x58] sm:$0xff] %v399
      %404 = vrot.lane.b32.xlu0 %v331, 96
      %v405 = vpop.permute.xlu0 %404
      %406 = vrot.lane.b32.xlu0 %v332, 96
      %v407 = vpop.permute.xlu0 %406
      %408 = vrot.lane.b32.xlu0 %v333, 96
      %v409 = vpop.permute.xlu0 %408
      %vm410 = vcmask 785408
      %v411 = vsel %vm410, %v405, %v407
      %v412 = vsel %vm410, %v407, %v409
      %415 = vst [vmem:[#allocation2 + $0x60] sm:$0xff] %v411
      %416 = vst [vmem:[#allocation2 + $0x68] sm:$0xff] %v412
      %417 = vrot.lane.b32.xlu0 %v331, 95
      %v418 = vpop.permute.xlu0 %417
      %419 = vrot.lane.b32.xlu0 %v332, 95
      %v420 = vpop.permute.xlu0 %419
      %421 = vrot.lane.b32.xlu0 %v333, 95
      %v422 = vpop.permute.xlu0 %421
      %vm423 = vcmask 777216
      %v424 = vsel %vm423, %v418, %v420
      %v425 = vsel %vm423, %v420, %v422
      %428 = vst [vmem:[#allocation2 + $0x70] sm:$0xff] %v424
      %429 = vst [vmem:[#allocation2 + $0x78] sm:$0xff] %v425
      %430 = vrot.lane.b32.xlu0 %v331, 94
      %v431 = vpop.permute.xlu0 %430
      %432 = vrot.lane.b32.xlu0 %v332, 94
      %v433 = vpop.permute.xlu0 %432
      %434 = vrot.lane.b32.xlu0 %v333, 94
      %v435 = vpop.permute.xlu0 %434
      %vm436 = vcmask 769024
      %v437 = vsel %vm436, %v431, %v433
      %v438 = vsel %vm436, %v433, %v435
      %441 = vst [vmem:[#allocation2 + $0x80] sm:$0xff] %v437
      %442 = vst [vmem:[#allocation2 + $0x88] sm:$0xff] %v438
      %v443 = vld [vmem:[%s312] sm:$0xff]
      %v444 = vld [vmem:[#allocation2] sm:$0xff]
      %v445 = vld [vmem:[#allocation2 + $0x8] sm:$0xff]
      %v446 = vld [vmem:[#allocation2 + $0x10] sm:$0xff]
      %v447 = vld [vmem:[#allocation2 + $0x18] sm:$0xff]
      %v448 = vld [vmem:[#allocation2 + $0x20] sm:$0xff]
      %v449 = vld [vmem:[#allocation2 + $0x28] sm:$0xff]
      %v450 = vld [vmem:[#allocation2 + $0x30] sm:$0xff]
      %v451 = vld [vmem:[#allocation2 + $0x38] sm:$0xff]
      %v452 = vld [vmem:[#allocation2 + $0x40] sm:$0xff]
      %v453 = vld [vmem:[#allocation2 + $0x48] sm:$0xff]
      %v454 = vld [vmem:[#allocation2 + $0x50] sm:$0xff]
      %v455 = vld [vmem:[#allocation2 + $0x58] sm:$0xff]
      %v456 = vld [vmem:[#allocation2 + $0x60] sm:$0xff]
      %v457 = vld [vmem:[#allocation2 + $0x68] sm:$0xff]
      %v458 = vld [vmem:[#allocation2 + $0x70] sm:$0xff]
      %v459 = vld [vmem:[#allocation2 + $0x78] sm:$0xff]
      %v460 = vld [vmem:[#allocation2 + $0x80] sm:$0xff]
      %v461 = vld [vmem:[#allocation2 + $0x88] sm:$0xff]
      %v462 = vld [vmem:[%s316] sm:$0xff]
      %464 = vset.pattern.permute.xlu0 0
      %465 = vperm.xlu0 %464, %v462
      %v466 = vpop.permute.xlu0 %465
      %vm468 = vcmask 588800
      %v470 = vsel %vm468, %v443, 0
      %472 = vmatprep.subr.mxu0 %v445
      %473 = vmatpush1.msra.mxu0 %v444
      %474 = vmatprep.subr.mxu0 %v447
      %475 = vmatpush1.msra.mxu0 %v446
      %476 = vmatprep.subr.mxu0 %v449
      %477 = vmatpush1.msra.mxu0 %v448
      %478 = vmatprep.subr.mxu0 %v451
      %479 = vmatpush1.msra.mxu0 %v450
      %480 = vmatprep.subr.mxu0 %v453
      %481 = vmatpush1.msra.mxu0 %v452
      %482 = vmatprep.subr.mxu0 %v455
      %483 = vmatpush1.msra.mxu0 %v454
      %484 = vmatprep.subr.mxu0 %v457
      %485 = vmatpush1.msra.mxu0 %v456
      %486 = vmatprep.subr.mxu0 %v459
      %487 = vmatpush1.msra.mxu0 %v458
      %488 = vmatprep.subr.mxu0 %v461
      %489 = vmatpush1.msra.mxu0 %v460
      %490 = vmatprep.subr.mxu0 0.0
      %491 = vmatpush1.msra.mxu0 0.0
      %492 = vmatprep.subr.mxu0 0.0
      %493 = vmatpush1.msra.mxu0 0.0
      %494 = vmatprep.subr.mxu0 0.0
      %495 = vmatpush1.msra.mxu0 0.0
      %496 = vmatprep.subr.mxu0 0.0
      %497 = vmatpush1.msra.mxu0 0.0
      %498 = vmatprep.subr.mxu0 0.0
      %499 = vmatpush1.msra.mxu0 0.0
      %500 = vmatprep.subr.mxu0 0.0
      %501 = vmatpush1.msra.mxu0 0.0
      %502 = vmatprep.subr.mxu0 0.0
      %503 = vmatpush1.msra.mxu0 0.0
      %504 = vmatprep.subr.mxu0 0.0
      %505 = vmatpush1.msra.mxu0 0.0
      %506 = vmatprep.subr.mxu0 0.0
      %507 = vmatpush1.msra.mxu0 0.0
      %508 = vmatprep.subr.mxu0 0.0
      %509 = vmatpush1.msra.mxu0 0.0
      %510 = vmatprep.subr.mxu0 0.0
      %511 = vmatpush1.msra.mxu0 0.0
      %512 = vmatprep.subr.mxu0 0.0
      %513 = vmatpush1.msra.mxu0 0.0
      %514 = vmatprep.subr.mxu0 0.0
      %515 = vmatpush1.msra.mxu0 0.0
      %516 = vmatprep.subr.mxu0 0.0
      %517 = vmatpush1.msra.mxu0 0.0
      %518 = vmatprep.subr.mxu0 0.0
      %519 = vmatpush1.msra.mxu0 0.0
      %520 = vmatprep.subr.mxu0 0.0
      %521 = vmatpush1.msra.mxu0 0.0
      %522 = vmatprep.subr.mxu0 0.0
      %523 = vmatpush1.msra.mxu0 0.0
      %524 = vmatprep.subr.mxu0 0.0
      %525 = vmatpush1.msra.mxu0 0.0
      %526 = vmatprep.subr.mxu0 0.0
      %527 = vmatpush1.msra.mxu0 0.0
      %528 = vmatprep.subr.mxu0 0.0
      %529 = vmatpush1.msra.mxu0 0.0
      %530 = vmatprep.subr.mxu0 0.0
      %531 = vmatpush1.msra.mxu0 0.0
      %532 = vmatprep.subr.mxu0 0.0
      %533 = vmatpush1.msra.mxu0 0.0
      %534 = vmatprep.subr.mxu0 0.0
      %535 = vmatpush1.msra.mxu0 0.0
      %536 = vmatprep.mubr.f32.mxu0 0.0
      %537 = vmatmul.mubr.f32.gmra.mrb[0].mxu0 %v470
      %v538 = vpop.f32.mrb[0].mxu0
      %v539 = vadd.f32 %v466, %v538
      %v540 = vpop.f32.mrb[0].mxu0
      %v541 = vadd.f32 %v466, %v540
      %542 = vdwg.mxu0
      %543 = vst [vmem:[%s329] sm:$0xff] %v539
      %544 = vst [vmem:[%s329 + $0x8] sm:$0xff] %v541
      %s545 = smul.u32 2, %s21
      %p546 = scmp.lt.s32.totalorder %s20, 1
      %s547 = scalar_select %p546, %s20, 1
      %p548 = scmp.lt.s32.totalorder %s22, 0
      %s549 = scalar_select %p548, %s22, 0
      %p550 = scmp.lt.s32.totalorder %s545, 1
      %s551 = scalar_select %p550, %s545, 1
      %s552 = smul.addr %s549, 2
      %s553 = sadd.s32 %s551, %s552
      %s554 = smul.addr %s547, 2
      %s555 = sadd.s32 %s553, %s554
      %s556 = smul.addr %s555, 8
      %s557 = scalar_lea.vmem %s4, %s556
      // Predicated region
      $region37: #{conv2d_pallas.1} parent=35 // pred_check
        %p558 = pneg %p166
      $region38: #{conv2d_pallas.1} parent=35 // pred_check_branch
        %560 = sbr.rel (%p558) target = $region40
      $region39: #{conv2d_pallas.1} parent=35 // pred_region
        %s561 = smul.u32 2, %s21
      $region40: #{conv2d_pallas.1} parent=35 // pred_fallthru
        _
    $region36: #{conv2d_pallas.1} parent=5 // pred_fallthru
      _
    %p562 = scmp.le.s32.totalorder 2, %s10
    // Predicated region
    $region41: #{conv2d_pallas.1} parent=5 // pred_check
      %p563 = pneg %p562
    $region42: #{conv2d_pallas.1} parent=5 // pred_check_branch
      %565 = sbr.rel (%p563) target = $region44
    $region43: #{conv2d_pallas.1} parent=5 // pred_region
      %s566 = ssub.s32 %s10, 2
      // Predicated region
      $region45: #{conv2d_pallas.1} parent=43 // pred_check
        %p567 = pneg %p172
      $region46: #{conv2d_pallas.1} parent=43 // pred_check_branch
        %569 = sbr.rel (%p567) target = $region48
      $region47: #{conv2d_pallas.1} parent=43 // pred_region
        %s570 = smul.u32 2, %s24
        %p571 = scmp.lt.s32.totalorder %s23, 1
        %s572 = scalar_select %p571, %s23, 1
        %p573 = scmp.lt.s32.totalorder %s25, 0
        %s574 = scalar_select %p573, %s25, 0
        %p575 = scmp.lt.s32.totalorder %s570, 1
        %s576 = scalar_select %p575, %s570, 1
        %s577 = smul.addr %s574, 2
        %s578 = sadd.s32 %s576, %s577
        %s579 = smul.addr %s572, 2
        %s580 = sadd.s32 %s578, %s579
        %s581 = smul.addr %s580, 8
        %s582 = scalar_lea.vmem %s4, %s581
      $region48: #{conv2d_pallas.1} parent=43 // pred_fallthru
        _
    $region44: #{conv2d_pallas.1} parent=5 // pred_fallthru
      _
  $region6: #{conv2d_pallas.1} parent=0 // loop_footer
    %s14 = sadd.s32 1, %s10
  $region7: #{conv2d_pallas.1} parent=0 // loop_footer_branch
    %9 = sbr.rel target = $region3
  $region8: #{conv2d_pallas.1} parent=0 // loop_exit
    _

</llo_original>
